<compile_context>
chip_gen: v7x
topology: tpu7x:2x2x1
jax: 0.10.0
libtpu: 0.0.40
codegen_flags: <defaults>
</compile_context>

<pallas_src>
import functools
import math

import jax
import jax.numpy as jnp
from jax.experimental import pallas as pl
from jax.experimental.pallas import tpu as pltpu

_LOG_HALF = math.log(0.5)


def _cdiv(a, b):
    return -(-a // b)


def _round_up(x, m):
    return ((x + m - 1) // m) * m


def _tensorcores_per_chip():
    # 2 TensorCores per chip only on v7x-like parts; v5e/v6e are single-TC.
    try:
        kind = jax.devices()[0].device_kind.lower()
    except Exception:
        return 1
    return 2 if "v7" in kind else 1


def _bce_terms(x, t):
    """a = t*log(sigmoid(x)) + (1-t)*log(1-sigmoid(x)), stably, then *2 where hard."""
    x = x.astype(jnp.float32)
    t = t.astype(jnp.float32)
    softplus = jnp.maximum(x, 0.0) + jnp.log1p(jnp.exp(-jnp.abs(x)))
    a = t * x - softplus
    return jnp.where(a <= jnp.float32(_LOG_HALF), a * 2.0, a)


def _bce_kernel(logits_ref, targets_ref, out_ref, *,
                valid_rows, tile_rows, lanes, may_mask):
    c = pl.program_id(0)          # split (one per TensorCore on v7x)
    i = pl.program_id(1)          # reduction step within this split

    @pl.when(i == 0)
    def _init():
        out_ref[...] = jnp.zeros((8, lanes), dtype=out_ref.dtype)

    a = _bce_terms(logits_ref[...], targets_ref[...])

    def _accumulate(vals):
        # VPU-only partial reduce into the resident (8, lanes) f32 accumulator.
        out_ref[...] += vals.reshape(tile_rows // 8, 8, lanes).sum(axis=0)

    if may_mask:
        block = c * pl.num_programs(1) + i
        row_start = block * tile_rows
        needs_mask = row_start + tile_rows > valid_rows

        @pl.when(jnp.logical_not(needs_mask))
        def _full_block():
            _accumulate(a)

        @pl.when(needs_mask)
        def _edge_block():
            # Only the (<= num_splits) edge/duplicated blocks pay for this.
            row = jax.lax.broadcasted_iota(jnp.int32, (tile_rows, lanes), 0)
            _accumulate(jnp.where(row < (valid_rows - row_start), a, 0.0))
    else:
        _accumulate(a)


def bce_with_l_loss(logits, targets, weight=None, *,
                    max_tile_rows=1024, num_cores=None):
    """Pallas implementation of BCEWithLLoss.forward. `weight` is unused
    (exactly as in the PyTorch module)."""
    del weight  # accepted but unused by the reference module
    total = int(logits.size)
    if total == 0:
        return jnp.float32(jnp.nan)   # torch.mean of empty -> nan

    flat_l = logits.reshape(-1)
    flat_t = targets.reshape(-1)

    # Tiny inputs (< 16 rows even at lanes=128): plain XLA, no kernel needed.
    if total < 16 * 128:
        return -(jnp.sum(_bce_terms(flat_l, flat_t)) / jnp.float32(total))

    # Lane width: prefer one that divides `total` (pure reshape, zero copies),
    # otherwise the widest that still gives >= 16 rows.
    lanes = next((c for c in (512, 256, 128)
                  if total % c == 0 and total // c >= 16), None)
    if lanes is None:
        lanes = 512
        while lanes > 128 and total // lanes < 16:
            lanes //= 2

    rows = total // lanes
    main = rows * lanes
    rem = total - main                 # < lanes elements, handled in XLA

    if num_cores is None:
        num_cores = _tensorcores_per_chip()
    max_tile_rows = max(16, (max_tile_rows // 16) * 16)

    # Balanced tiles: multiple of 16, <= rows (first block always in-bounds).
    nb0 = _cdiv(rows, max_tile_rows)
    tile_rows = min(_round_up(_cdiv(rows, nb0), 16), (rows // 16) * 16,
                    max_tile_rows)
    num_valid_blocks = _cdiv(rows, tile_rows)
    num_splits = max(1, min(num_cores, num_valid_blocks))
    steps = _cdiv(num_valid_blocks, num_splits)
    may_mask = num_splits * steps * tile_rows > rows   # static

    # Copy-free when lanes divides total; otherwise a single prefix slice.
    if rem:
        logits2d = flat_l[:main].reshape(rows, lanes)
        targets2d = flat_t[:main].reshape(rows, lanes)
    else:
        logits2d = flat_l.reshape(rows, lanes)
        targets2d = flat_t.reshape(rows, lanes)

    kernel = functools.partial(
        _bce_kernel, valid_rows=rows, tile_rows=tile_rows, lanes=lanes,
        may_mask=may_mask)

    last_block = num_valid_blocks - 1

    def in_map(c, i):
        # Clamp so overshoot blocks (possible when steps*num_splits rounds up)
        # re-read an in-bounds block; their contribution is masked to zero.
        return (jnp.minimum(c * steps + i, last_block), 0)

    in_block_bytes = tile_rows * lanes * (logits2d.dtype.itemsize
                                          + targets2d.dtype.itemsize)
    vmem_bytes = int(min(48 << 20,
                         max(16 << 20,
                             2 * in_block_bytes
                             + num_splits * 8 * lanes * 4 + (4 << 20))))

    bytes_accessed = (logits2d.size * logits2d.dtype.itemsize
                      + targets2d.size * targets2d.dtype.itemsize
                      + num_splits * 8 * lanes * 4)
    cost = pl.CostEstimate(flops=8 * total, transcendentals=2 * total,
                           bytes_accessed=bytes_accessed)

    partials = pl.pallas_call(
        kernel,
        out_shape=jax.ShapeDtypeStruct((num_splits, 8, lanes), jnp.float32),
        grid_spec=pltpu.PrefetchScalarGridSpec(
            num_scalar_prefetch=0,
            grid=(num_splits, steps),
            in_specs=[
                pl.BlockSpec((tile_rows, lanes), in_map),
                pl.BlockSpec((tile_rows, lanes), in_map),
            ],
            out_specs=pl.BlockSpec((None, 8, lanes), lambda c, i: (c, 0, 0)),
        ),
        compiler_params=pltpu.CompilerParams(
            dimension_semantics=("parallel", "arbitrary"),
            vmem_limit_bytes=vmem_bytes),
        cost_estimate=cost,
    )(logits2d, targets2d)

    a_sum = jnp.sum(partials)                       # tiny final reduce in XLA
    if rem:
        a_sum = a_sum + jnp.sum(_bce_terms(flat_l[main:], flat_t[main:]))
    return -(a_sum / jnp.float32(total))


def _reference(logits, targets):
    # Mirrors the PyTorch module verbatim.
    y_pred = jax.nn.sigmoid(logits.astype(jnp.float32))
    t = targets.astype(jnp.float32)
    a = t * jnp.log(y_pred) + (1.0 - t) * jnp.log(1.0 - y_pred)
    a = jnp.where(a <= math.log(0.5), a * 2.0, a)
    return -jnp.mean(a)


if __name__ == "__main__":
    key = jax.random.PRNGKey(0)
    k1, k2 = jax.random.split(key)

    # small shape consistent with a classifier head: (batch=2, channels=4, 16, 16)
    shape = (2, 4, 16, 16)
    logits = jax.random.normal(k1, shape, dtype=jnp.float32) * 2.0
    targets = jax.random.bernoulli(k2, 0.5, shape).astype(jnp.float32)
    weight = jnp.ones(shape, dtype=jnp.float32)  # unused by the module's forward

    loss = jax.block_until_ready(bce_with_l_loss(logits, targets, weight))
    ref = jax.block_until_ready(_reference(logits, targets))

    assert jnp.allclose(loss, ref, rtol=1e-5, atol=1e-5), (loss, ref)
    print("KERNEL_OK")
</pallas_src>

<mosaic_0001>
module attributes {stable_mosaic.version = 11 : i64} {
  func.func @_bce_kernel(%arg0: i32, %arg1: i32, %arg2: memref<16x128xf32, #tpu.memory_space<vmem>>, %arg3: memref<16x128xf32, #tpu.memory_space<vmem>>, %arg4: memref<1x8x128xf32, #tpu.memory_space<vmem>>) attributes {dimension_semantics = [#tpu.dimension_semantics<parallel>, #tpu.dimension_semantics<arbitrary>], iteration_bounds = array<i64: 1, 1>, scalar_prefetch = 0 : i64, scratch_operands = 0 : i64, tpu.core_type = #tpu.core_type<tc>, window_params = [{transform_indices = @transform_0, window_bounds = array<i64: 16, 128>}, {transform_indices = @transform_1, window_bounds = array<i64: 16, 128>}, {transform_indices = @transform_2, window_bounds = array<i64: 1, 8, 128>}]} {
    %c0_i32 = arith.constant 0 : i32
    %0 = arith.cmpi eq, %arg1, %c0_i32 : i32
    %1 = arith.extui %0 : i1 to i32
    %c0_i32_0 = arith.constant 0 : i32
    %2 = arith.cmpi ne, %1, %c0_i32_0 : i32
    scf.if %2 {
      %cst_14 = arith.constant 0.000000e+00 : f32
      %28 = vector.broadcast %cst_14 : f32 to vector<8x128xf32>
      %c0_15 = arith.constant 0 : index
      %c0_16 = arith.constant 0 : index
      %c0_17 = arith.constant 0 : index
      %29 = vector.load %arg4[%c0_15, %c0_16, %c0_17] : memref<1x8x128xf32, #tpu.memory_space<vmem>>, vector<1x8x128xf32>
      %30 = vector.shape_cast %29 : vector<1x8x128xf32> to vector<8x128xf32>
      %31 = vector.shape_cast %28 : vector<8x128xf32> to vector<1x8x128xf32>
      tpu.vector_store %arg4[%c0_15, %c0_16, %c0_17], %31 {strides = array<i32>} : memref<1x8x128xf32, #tpu.memory_space<vmem>>, vector<1x8x128xf32>,
    } else {
    }
    %c0 = arith.constant 0 : index
    %c0_1 = arith.constant 0 : index
    %3 = vector.load %arg2[%c0, %c0_1] : memref<16x128xf32, #tpu.memory_space<vmem>>, vector<16x128xf32>
    %c0_2 = arith.constant 0 : index
    %c0_3 = arith.constant 0 : index
    %4 = vector.load %arg3[%c0_2, %c0_3] : memref<16x128xf32, #tpu.memory_space<vmem>>, vector<16x128xf32>
    %cst = arith.constant 0.000000e+00 : f32
    %5 = vector.broadcast %cst : f32 to vector<16x128xf32>
    %6 = arith.maximumf %3, %5 : vector<16x128xf32>
    %7 = math.absf %3 : vector<16x128xf32>
    %cst_4 = arith.constant 0.000000e+00 : f32
    %8 = vector.broadcast %cst_4 : f32 to vector<16x128xf32>
    %9 = arith.subf %8, %7 : vector<16x128xf32>
    %10 = math.exp %9 : vector<16x128xf32>
    %11 = math.log1p %10 : vector<16x128xf32>
    %12 = arith.addf %6, %11 : vector<16x128xf32>
    %13 = arith.mulf %4, %3 : vector<16x128xf32>
    %14 = arith.subf %13, %12 : vector<16x128xf32>
    %cst_5 = arith.constant -0.693147182 : f32
    %15 = vector.broadcast %cst_5 : f32 to vector<16x128xf32>
    %16 = arith.cmpf ole, %14, %15 : vector<16x128xf32>
    %cst_6 = arith.constant 2.000000e+00 : f32
    %17 = vector.broadcast %cst_6 : f32 to vector<16x128xf32>
    %18 = arith.mulf %14, %17 : vector<16x128xf32>
    %19 = arith.select %16, %18, %14 : vector<16x128xi1>, vector<16x128xf32>
    %c0_7 = arith.constant 0 : index
    %c0_8 = arith.constant 0 : index
    %c0_9 = arith.constant 0 : index
    %20 = vector.load %arg4[%c0_7, %c0_8, %c0_9] : memref<1x8x128xf32, #tpu.memory_space<vmem>>, vector<1x8x128xf32>
    %21 = vector.shape_cast %20 : vector<1x8x128xf32> to vector<8x128xf32>
    %22 = vector.shape_cast %19 : vector<16x128xf32> to vector<2x8x128xf32>
    %cst_10 = arith.constant dense<0.000000e+00> : vector<8x128xf32>
    %23 = vector.multi_reduction <add>, %22, %cst_10 [0] : vector<2x8x128xf32> to vector<8x128xf32>
    %24 = arith.addf %21, %23 : vector<8x128xf32>
    %c0_11 = arith.constant 0 : index
    %c0_12 = arith.constant 0 : index
    %c0_13 = arith.constant 0 : index
    %25 = vector.load %arg4[%c0_11, %c0_12, %c0_13] : memref<1x8x128xf32, #tpu.memory_space<vmem>>, vector<1x8x128xf32>
    %26 = vector.shape_cast %25 : vector<1x8x128xf32> to vector<8x128xf32>
    %27 = vector.shape_cast %24 : vector<8x128xf32> to vector<1x8x128xf32>
    tpu.vector_store %arg4[%c0_11, %c0_12, %c0_13], %27 {strides = array<i32>} : memref<1x8x128xf32, #tpu.memory_space<vmem>>, vector<1x8x128xf32>,
    return
  }
  func.func @transform_0(%arg0: i32, %arg1: i32) -> (i32, i32) {
    %c1_i32 = arith.constant 1 : i32
    %0 = arith.muli %arg0, %c1_i32 : i32
    %1 = arith.addi %0, %arg1 : i32
    %c0_i32 = arith.constant 0 : i32
    %2 = arith.minsi %1, %c0_i32 : i32
    %c0_i32_0 = arith.constant 0 : i32
    %c0_i32_1 = arith.constant 0 : i32
    return %2, %c0_i32_0 : i32, i32
  }
  func.func @transform_1(%arg0: i32, %arg1: i32) -> (i32, i32) {
    %c1_i32 = arith.constant 1 : i32
    %0 = arith.muli %arg0, %c1_i32 : i32
    %1 = arith.addi %0, %arg1 : i32
    %c0_i32 = arith.constant 0 : i32
    %2 = arith.minsi %1, %c0_i32 : i32
    %c0_i32_0 = arith.constant 0 : i32
    %c0_i32_1 = arith.constant 0 : i32
    return %2, %c0_i32_0 : i32, i32
  }
  func.func @transform_2(%arg0: i32, %arg1: i32) -> (i32, i32, i32) {
    %c0_i32 = arith.constant 0 : i32
    %c0_i32_0 = arith.constant 0 : i32
    %c0_i32_1 = arith.constant 0 : i32
    return %arg0, %c0_i32, %c0_i32_0 : i32, i32, i32
  }
}

</mosaic_0001>

<llo_original>
// kernel: tpu_custom_call.1
$region0: #{tpu_custom_call.1}
  #allocation0 [shape = 'u32[]', space=smem, size = 0x4, offset = 0x4, fixed_abs, tag = 'smem constant byte address 0x4 - core index']
  #allocation1 [shape = 'u32[144,128]{1,0:T(1,128)}', space=vmem, size = 0x12000, scoped, tag = 'internal scratch']
  %s0 = inlined_call_operand.hbm [shape: f32[16,128], index: 0, kind: input, shape index: {}]
  %s1 = inlined_call_operand.hbm [shape: f32[16,128], index: 1, kind: input, shape index: {}]
  %s2 = inlined_call_operand.hbm [shape: f32[1,8,128], index: 2, kind: output, shape index: {}]
  %s3 = sld [smem:[#allocation0]]
  $region30: #{tpu_custom_call.1} parent=0
    _
  %s5 = ssub.s32 1, %s3
  %s6 = scalar_select 0, %s5, %s3
  $region1: #{tpu_custom_call.1} parent=0
    #allocation2 [shape = 'u8[8192]{0}', space=vmem, size = 0x2000, scoped, tag = 'input window, operand 0, single buffered']
    #allocation3 [shape = 's32[1]{0}', space=sflag, size = 0x4, scoped, tag = 'scoped memory for tpu_custom_call.1']
    #allocation4 [shape = 's32[1]{0}', space=sflag, size = 0x4, scoped, tag = 'scoped memory for tpu_custom_call.1']
    #allocation5 [shape = 'u8[8192]{0}', space=vmem, size = 0x2000, scoped, tag = 'input window, operand 1, single buffered']
    #allocation6 [shape = 's32[1]{0}', space=sflag, size = 0x4, scoped, tag = 'scoped memory for tpu_custom_call.1']
    #allocation7 [shape = 'u8[4096]{0}', space=vmem, size = 0x1000, scoped, tag = 'output window, operand 0, single buffered']
    %7 = vsyncpa [#allocation3], 0
    %8 = vsyncpa [#allocation6], 0
    %9 = vsyncpa [#allocation4], 0
    // Predicated region
    $region2: #{tpu_custom_call.1} parent=1 // pred_check
      _
    $region3: #{tpu_custom_call.1} parent=1 // pred_check_branch
      %11 = sbr.rel (0) target = $region5
    $region4: #{tpu_custom_call.1} parent=1 // pred_region
      %s12 = sadd.s32 0, 0
      %p13 = scmp.lt.s32.totalorder %s12, 0
      %s14 = scalar_select %p13, %s12, 0
      %s15 = smul.u32 2, %s14
      %s17 = ssub.s32 256, 256
      %18 = vsyncadd [#allocation3], %s17
      %s19 = smul.addr %s15, 128
      %s20 = scalar_lea.hbm %s0, %s19
      %s21 = sshll.u32 [#allocation2], 4
      %s22 = int_to_ptr.vmem [resolvable:$true] %s21
      %27 = dma.hbm_to_vmem [thread:$0]  %s20, 256, %s22, [#allocation3], 128, 128, 8
    $region5: #{tpu_custom_call.1} parent=1 // pred_fallthru
      _
    // Predicated region
    $region6: #{tpu_custom_call.1} parent=1 // pred_check
      _
    $region7: #{tpu_custom_call.1} parent=1 // pred_check_branch
      %29 = sbr.rel (0) target = $region9
    $region8: #{tpu_custom_call.1} parent=1 // pred_region
      %s30 = sadd.s32 0, 0
      %p31 = scmp.lt.s32.totalorder %s30, 0
      %s32 = scalar_select %p31, %s30, 0
      %s33 = smul.u32 2, %s32
      %s35 = ssub.s32 256, 256
      %36 = vsyncadd [#allocation6], %s35
      %s37 = smul.addr %s33, 128
      %s38 = scalar_lea.hbm %s1, %s37
      %s39 = sshll.u32 [#allocation5], 4
      %s40 = int_to_ptr.vmem [resolvable:$true] %s39
      %45 = dma.hbm_to_vmem [thread:$0]  %s38, 256, %s40, [#allocation6], 128, 128, 8
    $region9: #{tpu_custom_call.1} parent=1 // pred_fallthru
      _
    // Predicated region
    $region10: #{tpu_custom_call.1} parent=1 // pred_check
      _
    $region11: #{tpu_custom_call.1} parent=1 // pred_check_branch
      %47 = sbr.rel (0) target = $region13
    $region12: #{tpu_custom_call.1} parent=1 // pred_region
      %48 = dma.done [#allocation3], 256
    $region13: #{tpu_custom_call.1} parent=1 // pred_fallthru
      _
    // Predicated region
    $region14: #{tpu_custom_call.1} parent=1 // pred_check
      _
    $region15: #{tpu_custom_call.1} parent=1 // pred_check_branch
      %50 = sbr.rel (0) target = $region17
    $region16: #{tpu_custom_call.1} parent=1 // pred_region
      %51 = dma.done [#allocation6], 256
    $region17: #{tpu_custom_call.1} parent=1 // pred_fallthru
      _
    %s52 = sadd.s32 0, 0
    %p53 = scmp.lt.s32.totalorder %s52, 0
    %s54 = scalar_select %p53, %s52, 0
    %s55 = smul.u32 2, %s54
    %s56 = sadd.s32 0, 0
    %p57 = scmp.lt.s32.totalorder %s56, 0
    %s58 = scalar_select %p57, %s56, 0
    %s59 = smul.u32 2, %s58
    %p60 = scmp.eq.s32.totalorder 0, 0
    // Predicated region
    $region18: #{tpu_custom_call.1} parent=1 // pred_check
      %p61 = pneg %p60
    $region19: #{tpu_custom_call.1} parent=1 // pred_check_branch
      %63 = sbr.rel (%p61) target = $region21
    $region20: #{tpu_custom_call.1} parent=1 // pred_region
      %64 = vst [vmem:[#allocation7] sm:$0xff] 0.0
    $region21: #{tpu_custom_call.1} parent=1 // pred_fallthru
      _
    %v65 = vld [vmem:[#allocation2] sm:$0xff]
    %v66 = vld [vmem:[#allocation2 + $0x8] sm:$0xff]
    %v67 = vld [vmem:[#allocation5] sm:$0xff]
    %v68 = vld [vmem:[#allocation5 + $0x8] sm:$0xff]
    %v69 = vmax.f32 %v65, 0.0
    %v70 = vmax.f32 %v66, 0.0
    %v71 = vand.u32 2147483647, %v65
    %v72 = vand.u32 2147483647, %v66
    %v73 = vsub.f32 0.0, %v71
    %v74 = vsub.f32 0.0, %v72
    %v75 = vmul.f32 %v73, 1.442695
    %v76 = vpow.pop %v75
    %v77 = vmul.f32 %v74, 1.442695
    %v78 = vpow.pop %v77
    %v79 = vadd.f32 %v76, 1.0
    %v80 = vlog2.pop %v79
    %v81 = vmul.f32 %v80, 0.6931472
    %v82 = vmul.f32 -0.5, %v76
    %v83 = vadd.f32 %v82, 1.0
    %v84 = vmul.f32 %v83, %v76
    %v85 = vand.u32 2147483647, %v76
    %vm86 = vcmp.lt.f32.partialorder %v85, 0.0004427343
    %v87 = vsel %vm86, %v84, %v81
    %v88 = vadd.f32 %v78, 1.0
    %v89 = vlog2.pop %v88
    %v90 = vmul.f32 %v89, 0.6931472
    %v91 = vmul.f32 -0.5, %v78
    %v92 = vadd.f32 %v91, 1.0
    %v93 = vmul.f32 %v92, %v78
    %v94 = vand.u32 2147483647, %v78
    %vm95 = vcmp.lt.f32.partialorder %v94, 0.0004427343
    %v96 = vsel %vm95, %v93, %v90
    %v97 = vadd.f32 %v69, %v87
    %v98 = vadd.f32 %v70, %v96
    %v99 = vmul.f32 %v67, %v65
    %v100 = vmul.f32 %v68, %v66
    %v101 = vsub.f32 %v99, %v97
    %v102 = vsub.f32 %v100, %v98
    %vm103 = vcmp.le.f32.partialorder %v101, -0.6931472
    %vm104 = vcmp.le.f32.partialorder %v102, -0.6931472
    %v105 = vmul.f32 %v101, 2.0
    %v106 = vmul.f32 %v102, 2.0
    %v107 = vsel %vm103, %v105, %v101
    %v108 = vsel %vm104, %v106, %v102
    %v109 = vld [vmem:[#allocation7] sm:$0xff]
    %v110 = vadd.f32 %v107, %v108
    %v111 = vadd.f32 %v109, %v110
    %112 = vst [vmem:[#allocation7] sm:$0xff] %v111
    // Predicated region
    $region22: #{tpu_custom_call.1} parent=1 // pred_check
      _
    $region23: #{tpu_custom_call.1} parent=1 // pred_check_branch
      %114 = sbr.rel (0) target = $region25
    $region24: #{tpu_custom_call.1} parent=1 // pred_region
      %s116 = ssub.s32 128, 128
      %117 = vsyncadd [#allocation4], %s116
      %s119 = sshll.u32 [#allocation7], 4
      %s120 = int_to_ptr.vmem [resolvable:$true] %s119
      %122 = dma.vmem_to_hbm [thread:$0]  %s120, 128, %s2, [#allocation4]
    $region25: #{tpu_custom_call.1} parent=1 // pred_fallthru
      _
    // Predicated region
    $region26: #{tpu_custom_call.1} parent=1 // pred_check
      _
    $region27: #{tpu_custom_call.1} parent=1 // pred_check_branch
      %124 = sbr.rel (0) target = $region29
    $region28: #{tpu_custom_call.1} parent=1 // pred_region
      %125 = dma.done [#allocation4], 128
    $region29: #{tpu_custom_call.1} parent=1 // pred_fallthru
      _
    %126 = vsyncpa [#allocation3], 1
    %127 = vsyncpa [#allocation6], 1
    %128 = vsyncpa [#allocation4], 1

</llo_original>
